<compile_context>
chip_gen: v5e
topology: v5e:2x2
jax: 0.10.0
libtpu: 0.0.40
codegen_flags: <defaults>
</compile_context>

<pallas_src>
import math

import numpy as np

import jax
import jax.numpy as jnp
from jax import lax
from jax.experimental import pallas as pl
from jax.experimental.pallas import tpu as pltpu


# ------------------------------ in-kernel exact GELU ------------------------------

_SQRT_HALF = 0.7071067811865476
_ERF_P = 0.3275911
_ERF_A = (0.254829592, -0.284496736, 1.421413741, -1.453152027, 1.061405429)


def _erf(x):
    """Abramowitz & Stegun 7.1.26 erf approximation, |err| <= 1.5e-7 (in f32).

    The divide is replaced by an EUP approximate reciprocal; exp also goes to the EUP,
    so only mul/add/abs/where remain on the VALU.
    """
    a1, a2, a3, a4, a5 = _ERF_A
    ax = jnp.abs(x)
    t = pl.reciprocal(1.0 + _ERF_P * ax, approx=True)     # EUP vrcp (off the VALU)
    poly = ((((a5 * t + a4) * t + a3) * t + a2) * t + a1) * t
    y = 1.0 - poly * jnp.exp(-ax * ax)                     # exp -> EUP
    return jnp.where(x >= 0.0, y, -y)


def _gelu_exact(x):
    """torch.nn.GELU() default (exact erf form), computed in f32."""
    return 0.5 * x * (1.0 + _erf(x * _SQRT_HALF))


# ---------------------------------- Pallas kernel ----------------------------------

def _make_rconvblock_kernel(K, dilation, pad, TL, C, HB, lead, wide):
    """Fused GELU + halo assembly + dilated Conv1d + folded-BN shift + residual.

    Scratch row r holds GELU(x_global[tile_start + r - lead]) (zero outside [0, L));
    output row t of the tile reads scratch rows lead - pad + t + k*dilation, k=0..K-1.
    """
    base = lead - pad  # first scratch row read by tap 0

    def kernel(x_ref, prev_ref, next_ref, w_ref, shift_ref, o_ref, xp_ref):
        j = pl.program_id(1)
        nj = pl.num_programs(1)

        # Interior rows: GELU of the tile, stored at a sublane-aligned offset
        # (lead % 16 == 0 for bf16) -> plain unmasked vst.  No full-scratch zero-fill.
        xp_ref[lead:lead + TL, :] = _gelu_exact(x_ref[0]).astype(xp_ref.dtype)

        if pad > 0:
            # Leading pad rows: GELU of the previous tile's tail, or zeros at j == 0.
            @pl.when(j > 0)
            def _():
                xp_ref[lead - pad:lead, :] = _gelu_exact(
                    prev_ref[0, HB - pad:HB, :]).astype(xp_ref.dtype)

            @pl.when(j == 0)
            def _():
                xp_ref[lead - pad:lead, :] = jnp.zeros((pad, C), xp_ref.dtype)

            # Trailing pad rows: GELU of the next tile's head, or zeros at j == last.
            @pl.when(j < nj - 1)
            def _():
                xp_ref[lead + TL:lead + TL + pad, :] = _gelu_exact(
                    next_ref[0, :pad, :]).astype(xp_ref.dtype)

            @pl.when(j == nj - 1)
            def _():
                xp_ref[lead + TL:lead + TL + pad, :] = jnp.zeros((pad, C), xp_ref.dtype)

        if wide:
            # v6e/v7x: im2col the K taps -> one (TL, K*C) @ (K*C, C) bf16 matmul with
            # a 256-deep contraction; per-tap f32 adds move into the MXU accumulator.
            lhs = jnp.concatenate(
                [xp_ref[base + k * dilation: base + k * dilation + TL, :]
                 for k in range(K)], axis=1)
            acc = jnp.dot(lhs, w_ref[...], preferred_element_type=jnp.float32)
            acc = acc + shift_ref[...]                      # folded bias + BN affine
        else:
            # v5e: 128x128 MXU -> per-tap 128-deep matmuls already fill the array.
            # Shift is folded into the accumulator init (no separate add pass).
            acc = jnp.broadcast_to(shift_ref[...], (TL, C))
            for k in range(K):
                off = base + k * dilation
                acc = acc + jnp.dot(xp_ref[off:off + TL, :], w_ref[k],
                                    preferred_element_type=jnp.float32)

        # Residual add; x is re-read here so its value is not live across the matmuls.
        o_ref[0] = (acc + x_ref[0]).astype(o_ref.dtype)

    return kernel


# ----------------------------------- host wrapper -----------------------------------

def _prefer_wide_contraction():
    """True on chips with a 256-deep MXU (v6e/v7x); False on v5e and older."""
    try:
        kind = jax.devices()[0].device_kind.lower()
    except Exception:
        return False
    return not any(s in kind for s in ("v2", "v3", "v4", "v5"))


def _round_up(x, m):
    return -(-x // m) * m


def _pick_tile_l(L, HB, target=1024):
    """Largest L-tile <= target that divides L and is a multiple of lcm(16, HB)."""
    base = 16 * HB // math.gcd(16, HB)
    best = 0
    t = base
    while t <= min(L, target):
        if L % t == 0:
            best = t
        t += base
    return best if best > 0 else L


def _vmem_limit_bytes(TL, C, K, HB, lead):
    f32, bf16 = 4, 2
    blocks = (TL * C * f32           # x tile
              + 2 * HB * C * f32     # prev/next halo tiles
              + K * C * C * bf16     # BN-folded conv weights
              + C * f32              # per-channel shift
              + TL * C * f32)        # output tile
    scratch = (2 * lead + TL) * C * bf16
    est = 2 * blocks + scratch       # double-buffered pipeline stages + scratch
    # Explicit budget (review: v7x has only 64 MiB physical / 32 MiB default scoped,
    # v5e default scoped is 16 MiB); keep the request modest but >= 2x the estimate.
    return int(min(max(2 * est, 8 * 2 ** 20), 32 * 2 ** 20))


def rconvblock_apply(x, params, kernel_size, dilation, *, tile_l=None):
    """x: (N, L, C) channels-last. params['w']: (K, C, C) bf16 (BN-folded), ['shift']: (C,)."""
    N, L, C = x.shape
    K, d = kernel_size, dilation
    pad = K // 2 + d - 1
    assert 2 * pad == d * (K - 1), "residual add requires a length-preserving conv (odd K)"
    w = params["w"]
    assert w.shape == (K, C, C), "residual add requires n_filters == in_channels"

    HB = max(8, _round_up(pad, 8))       # halo block rows (sublane multiple, >= pad)
    lead = max(16, _round_up(pad, 16))   # bf16-sublane-aligned interior offset in scratch

    TL = _pick_tile_l(L, HB) if tile_l is None else tile_l
    assert L % TL == 0 and TL % 16 == 0 and TL % HB == 0 and TL >= HB, (L, TL, HB)
    R = TL // HB
    n_lt = L // TL
    n_hb = L // HB

    wide = _prefer_wide_contraction()
    if wide:
        w_arg = w.reshape(K * C, C)      # tap-major contraction layout for im2col
        w_spec = pl.BlockSpec((K * C, C), lambda i, j: (0, 0))
    else:
        w_arg = w
        w_spec = pl.BlockSpec((K, C, C), lambda i, j: (0, 0, 0))

    shift = params["shift"].reshape(1, C).astype(jnp.float32)
    kernel = _make_rconvblock_kernel(K, d, pad, TL, C, HB, lead, wide)

    return pl.pallas_call(
        kernel,
        out_shape=jax.ShapeDtypeStruct((N, L, C), x.dtype),
        grid=(N, n_lt),
        in_specs=[
            # main tile (also the residual source)
            pl.BlockSpec((1, TL, C), lambda i, j: (i, j, 0)),
            # previous-neighbour halo block (clamped at the left edge, masked in-kernel)
            pl.BlockSpec((1, HB, C), lambda i, j: (i, jnp.maximum(j * R - 1, 0), 0)),
            # next-neighbour halo block (clamped at the right edge, masked in-kernel)
            pl.BlockSpec((1, HB, C),
                         lambda i, j: (i, jnp.minimum((j + 1) * R, n_hb - 1), 0)),
            w_spec,                                         # BN-folded bf16 conv weights
            pl.BlockSpec((1, C), lambda i, j: (0, 0)),      # per-channel shift
        ],
        out_specs=pl.BlockSpec((1, TL, C), lambda i, j: (i, j, 0)),
        scratch_shapes=[pltpu.VMEM((2 * lead + TL, C), jnp.bfloat16)],
        compiler_params=pltpu.CompilerParams(
            dimension_semantics=("parallel", "parallel"),   # batch x L-tiles (v7x: 2 TCs)
            vmem_limit_bytes=_vmem_limit_bytes(TL, C, K, HB, lead),
        ),
    )(x, x, x, w_arg, shift)


# --------------------------- parameter init (deterministic) ------------------------

def init_rconvblock_params(key, in_channels, n_filters, kernel_size):
    """Conv1d + eval-mode BatchNorm1d with synthetic running stats.

    BN scale (gamma * rsqrt(var + eps)) is folded into bf16 conv weights for the
    kernel; the raw f32 pieces are kept for the unfolded torch-semantics reference.
    """
    kw, kb, kg, kbeta, km, kv = jax.random.split(key, 6)
    fan = in_channels * kernel_size
    bound = 1.0 / np.sqrt(fan)
    w = jax.random.uniform(kw, (kernel_size, in_channels, n_filters),
                           jnp.float32, -bound, bound)
    b = jax.random.uniform(kb, (n_filters,), jnp.float32, -bound, bound)

    gamma = 1.0 + 0.1 * jax.random.normal(kg, (n_filters,), jnp.float32)
    beta = 0.1 * jax.random.normal(kbeta, (n_filters,), jnp.float32)
    rmean = 0.1 * jax.random.normal(km, (n_filters,), jnp.float32)
    rvar = 1.0 + 0.1 * jax.random.uniform(kv, (n_filters,), jnp.float32)

    scale = gamma * lax.rsqrt(rvar + 1e-5)
    w_folded = (w * scale[None, None, :]).astype(jnp.bfloat16)
    shift = (b - rmean) * scale + beta
    raw = {"w": w, "b": b, "gamma": gamma, "beta": beta, "mean": rmean, "var": rvar}
    return {"w": w_folded, "shift": shift, "raw": raw}


# ------------------- pure-JAX reference (unfolded, f32, torch semantics) ------------

def rconvblock_reference(x, raw, kernel_size, dilation):
    K, d = kernel_size, dilation
    pad = K // 2 + d - 1
    N, L, C = x.shape
    g = jax.nn.gelu(x, approximate=False)
    gp = jnp.pad(g, ((0, 0), (pad, pad), (0, 0)))
    conv = jnp.zeros((N, L, raw["w"].shape[-1]), jnp.float32)
    for k in range(K):
        off = k * d
        conv = conv + jnp.einsum("nlc,cf->nlf", gp[:, off:off + L, :], raw["w"][k])
    conv = conv + raw["b"][None, None, :]
    bn = ((conv - raw["mean"]) * (raw["gamma"] * lax.rsqrt(raw["var"] + 1e-5))
          + raw["beta"])
    return bn + x


# --------------------------------------- main --------------------------------------

if __name__ == "__main__":
    in_channels = 128          # lane-dense channel count (fills the 128-wide lane axis)
    n_filters = 128            # residual add requires n_filters == in_channels
    kernel_size = 3
    dilation = 2               # exercises dilated 'same' padding (pad = 2)
    N, L = 2, 128
    TILE_L = 64                # 2 L-tiles per sample -> exercises the halo exchange

    key = jax.random.PRNGKey(0)
    kp, kx = jax.random.split(key)
    params = init_rconvblock_params(kp, in_channels, n_filters, kernel_size)
    x = jax.random.normal(kx, (N, L, in_channels), jnp.float32)

    @jax.jit
    def fwd(xx):
        return rconvblock_apply(xx, params, kernel_size, dilation, tile_l=TILE_L)

    y = jax.block_until_ready(fwd(x))
    y_ref = rconvblock_reference(x, params["raw"], kernel_size, dilation)

    assert y.shape == (N, L, n_filters), y.shape
    assert bool(jnp.all(jnp.isfinite(y)))
    max_err = float(jnp.max(jnp.abs(y - y_ref)))
    # bf16 MXU operands (incl. BN-folded bf16 weights) + EUP approx reciprocal in the
    # erf vs an unfolded f32 exact reference -> small absolute tolerance.
    assert max_err < 4e-2, max_err
    print("KERNEL_OK")
</pallas_src>

<mosaic_0001>
module attributes {stable_mosaic.version = 11 : i64} {
  func.func @kernel(%arg0: i32, %arg1: i32, %arg2: memref<1x64x128xf32, #tpu.memory_space<vmem>>, %arg3: memref<1x8x128xf32, #tpu.memory_space<vmem>>, %arg4: memref<1x8x128xf32, #tpu.memory_space<vmem>>, %arg5: memref<384x128xbf16, #tpu.memory_space<vmem>>, %arg6: memref<1x128xf32, #tpu.memory_space<vmem>>, %arg7: memref<1x64x128xf32, #tpu.memory_space<vmem>>, %arg8: memref<96x128xbf16, #tpu.memory_space<vmem>>) attributes {dimension_semantics = [#tpu.dimension_semantics<parallel>, #tpu.dimension_semantics<parallel>], iteration_bounds = array<i64: 2, 2>, scalar_prefetch = 0 : i64, scratch_operands = 1 : i64, tpu.core_type = #tpu.core_type<tc>, window_params = [{transform_indices = @transform_0, window_bounds = array<i64: 1, 64, 128>}, {transform_indices = @transform_1, window_bounds = array<i64: 1, 8, 128>}, {transform_indices = @transform_2, window_bounds = array<i64: 1, 8, 128>}, {pipeline_mode = #tpu.pipeline_mode<synchronous>, transform_indices = @transform_3, window_bounds = array<i64: 384, 128>}, {pipeline_mode = #tpu.pipeline_mode<synchronous>, transform_indices = @transform_4, window_bounds = array<i64: 1, 128>}, {transform_indices = @transform_5, window_bounds = array<i64: 1, 64, 128>}]} {
    %c0 = arith.constant 0 : index
    %c0_0 = arith.constant 0 : index
    %c0_1 = arith.constant 0 : index
    %0 = vector.load %arg2[%c0, %c0_0, %c0_1] : memref<1x64x128xf32, #tpu.memory_space<vmem>>, vector<1x64x128xf32>
    %1 = vector.shape_cast %0 : vector<1x64x128xf32> to vector<64x128xf32>
    %cst = arith.constant 5.000000e-01 : f32
    %2 = vector.broadcast %cst : f32 to vector<64x128xf32>
    %3 = arith.mulf %2, %1 : vector<64x128xf32>
    %cst_2 = arith.constant 0.707106769 : f32
    %4 = vector.broadcast %cst_2 : f32 to vector<64x128xf32>
    %5 = arith.mulf %1, %4 : vector<64x128xf32>
    %6 = math.absf %5 : vector<64x128xf32>
    %cst_3 = arith.constant 0.327591091 : f32
    %7 = vector.broadcast %cst_3 : f32 to vector<64x128xf32>
    %8 = arith.mulf %7, %6 : vector<64x128xf32>
    %cst_4 = arith.constant 1.000000e+00 : f32
    %9 = vector.broadcast %cst_4 : f32 to vector<64x128xf32>
    %10 = arith.addf %9, %8 : vector<64x128xf32>
    %11 = tpu.reciprocal %10 {approx = true} : vector<64x128xf32> -> vector<64x128xf32>
    %cst_5 = arith.constant 1.06140542 : f32
    %12 = vector.broadcast %cst_5 : f32 to vector<64x128xf32>
    %13 = arith.mulf %12, %11 : vector<64x128xf32>
    %cst_6 = arith.constant -1.45315206 : f32
    %14 = vector.broadcast %cst_6 : f32 to vector<64x128xf32>
    %15 = arith.addf %13, %14 : vector<64x128xf32>
    %16 = arith.mulf %15, %11 : vector<64x128xf32>
    %cst_7 = arith.constant 1.42141378 : f32
    %17 = vector.broadcast %cst_7 : f32 to vector<64x128xf32>
    %18 = arith.addf %16, %17 : vector<64x128xf32>
    %19 = arith.mulf %18, %11 : vector<64x128xf32>
    %cst_8 = arith.constant -0.284496725 : f32
    %20 = vector.broadcast %cst_8 : f32 to vector<64x128xf32>
    %21 = arith.addf %19, %20 : vector<64x128xf32>
    %22 = arith.mulf %21, %11 : vector<64x128xf32>
    %cst_9 = arith.constant 0.254829586 : f32
    %23 = vector.broadcast %cst_9 : f32 to vector<64x128xf32>
    %24 = arith.addf %22, %23 : vector<64x128xf32>
    %25 = arith.mulf %24, %11 : vector<64x128xf32>
    %cst_10 = arith.constant 0.000000e+00 : f32
    %26 = vector.broadcast %cst_10 : f32 to vector<64x128xf32>
    %27 = arith.subf %26, %6 : vector<64x128xf32>
    %28 = arith.mulf %27, %6 : vector<64x128xf32>
    %29 = math.exp %28 : vector<64x128xf32>
    %30 = arith.mulf %25, %29 : vector<64x128xf32>
    %cst_11 = arith.constant 1.000000e+00 : f32
    %31 = vector.broadcast %cst_11 : f32 to vector<64x128xf32>
    %32 = arith.subf %31, %30 : vector<64x128xf32>
    %cst_12 = arith.constant 0.000000e+00 : f32
    %33 = vector.broadcast %cst_12 : f32 to vector<64x128xf32>
    %34 = arith.cmpf oge, %5, %33 : vector<64x128xf32>
    %cst_13 = arith.constant 0.000000e+00 : f32
    %35 = vector.broadcast %cst_13 : f32 to vector<64x128xf32>
    %36 = arith.subf %35, %32 : vector<64x128xf32>
    %37 = arith.select %34, %32, %36 : vector<64x128xi1>, vector<64x128xf32>
    %cst_14 = arith.constant 1.000000e+00 : f32
    %38 = vector.broadcast %cst_14 : f32 to vector<64x128xf32>
    %39 = arith.addf %38, %37 : vector<64x128xf32>
    %40 = arith.mulf %3, %39 : vector<64x128xf32>
    %41 = arith.truncf %40 : vector<64x128xf32> to vector<64x128xbf16>
    %c16 = arith.constant 16 : index
    %c0_15 = arith.constant 0 : index
    %42 = vector.load %arg8[%c16, %c0_15] : memref<96x128xbf16, #tpu.memory_space<vmem>>, vector<64x128xbf16>
    tpu.vector_store %arg8[%c16, %c0_15], %41 {strides = array<i32>} : memref<96x128xbf16, #tpu.memory_space<vmem>>, vector<64x128xbf16>,
    %c0_i32 = arith.constant 0 : i32
    %43 = arith.cmpi sgt, %arg1, %c0_i32 : i32
    %44 = arith.extui %43 : i1 to i32
    %c0_i32_16 = arith.constant 0 : i32
    %45 = arith.cmpi ne, %44, %c0_i32_16 : i32
    scf.if %45 {
      %c0_37 = arith.constant 0 : index
      %c6 = arith.constant 6 : index
      %c0_38 = arith.constant 0 : index
      %70 = vector.load %arg3[%c0_37, %c6, %c0_38] : memref<1x8x128xf32, #tpu.memory_space<vmem>>, vector<1x2x128xf32>
      %71 = vector.shape_cast %70 : vector<1x2x128xf32> to vector<2x128xf32>
      %cst_39 = arith.constant 5.000000e-01 : f32
      %72 = vector.broadcast %cst_39 : f32 to vector<2x128xf32>
      %73 = arith.mulf %72, %71 : vector<2x128xf32>
      %cst_40 = arith.constant 0.707106769 : f32
      %74 = vector.broadcast %cst_40 : f32 to vector<2x128xf32>
      %75 = arith.mulf %71, %74 : vector<2x128xf32>
      %76 = math.absf %75 : vector<2x128xf32>
      %cst_41 = arith.constant 0.327591091 : f32
      %77 = vector.broadcast %cst_41 : f32 to vector<2x128xf32>
      %78 = arith.mulf %77, %76 : vector<2x128xf32>
      %cst_42 = arith.constant 1.000000e+00 : f32
      %79 = vector.broadcast %cst_42 : f32 to vector<2x128xf32>
      %80 = arith.addf %79, %78 : vector<2x128xf32>
      %81 = tpu.reciprocal %80 {approx = true} : vector<2x128xf32> -> vector<2x128xf32>
      %cst_43 = arith.constant 1.06140542 : f32
      %82 = vector.broadcast %cst_43 : f32 to vector<2x128xf32>
      %83 = arith.mulf %82, %81 : vector<2x128xf32>
      %cst_44 = arith.constant -1.45315206 : f32
      %84 = vector.broadcast %cst_44 : f32 to vector<2x128xf32>
      %85 = arith.addf %83, %84 : vector<2x128xf32>
      %86 = arith.mulf %85, %81 : vector<2x128xf32>
      %cst_45 = arith.constant 1.42141378 : f32
      %87 = vector.broadcast %cst_45 : f32 to vector<2x128xf32>
      %88 = arith.addf %86, %87 : vector<2x128xf32>
      %89 = arith.mulf %88, %81 : vector<2x128xf32>
      %cst_46 = arith.constant -0.284496725 : f32
      %90 = vector.broadcast %cst_46 : f32 to vector<2x128xf32>
      %91 = arith.addf %89, %90 : vector<2x128xf32>
      %92 = arith.mulf %91, %81 : vector<2x128xf32>
      %cst_47 = arith.constant 0.254829586 : f32
      %93 = vector.broadcast %cst_47 : f32 to vector<2x128xf32>
      %94 = arith.addf %92, %93 : vector<2x128xf32>
      %95 = arith.mulf %94, %81 : vector<2x128xf32>
      %cst_48 = arith.constant 0.000000e+00 : f32
      %96 = vector.broadcast %cst_48 : f32 to vector<2x128xf32>
      %97 = arith.subf %96, %76 : vector<2x128xf32>
      %98 = arith.mulf %97, %76 : vector<2x128xf32>
      %99 = math.exp %98 : vector<2x128xf32>
      %100 = arith.mulf %95, %99 : vector<2x128xf32>
      %cst_49 = arith.constant 1.000000e+00 : f32
      %101 = vector.broadcast %cst_49 : f32 to vector<2x128xf32>
      %102 = arith.subf %101, %100 : vector<2x128xf32>
      %cst_50 = arith.constant 0.000000e+00 : f32
      %103 = vector.broadcast %cst_50 : f32 to vector<2x128xf32>
      %104 = arith.cmpf oge, %75, %103 : vector<2x128xf32>
      %cst_51 = arith.constant 0.000000e+00 : f32
      %105 = vector.broadcast %cst_51 : f32 to vector<2x128xf32>
      %106 = arith.subf %105, %102 : vector<2x128xf32>
      %107 = arith.select %104, %102, %106 : vector<2x128xi1>, vector<2x128xf32>
      %cst_52 = arith.constant 1.000000e+00 : f32
      %108 = vector.broadcast %cst_52 : f32 to vector<2x128xf32>
      %109 = arith.addf %108, %107 : vector<2x128xf32>
      %110 = arith.mulf %73, %109 : vector<2x128xf32>
      %111 = arith.truncf %110 : vector<2x128xf32> to vector<2x128xbf16>
      %c14_53 = arith.constant 14 : index
      %c0_54 = arith.constant 0 : index
      %112 = vector.load %arg8[%c14_53, %c0_54] : memref<96x128xbf16, #tpu.memory_space<vmem>>, vector<2x128xbf16>
      tpu.vector_store %arg8[%c14_53, %c0_54], %111 {strides = array<i32>} : memref<96x128xbf16, #tpu.memory_space<vmem>>, vector<2x128xbf16>,
    } else {
    }
    %c0_i32_17 = arith.constant 0 : i32
    %46 = arith.cmpi eq, %arg1, %c0_i32_17 : i32
    %47 = arith.extui %46 : i1 to i32
    %c0_i32_18 = arith.constant 0 : i32
    %48 = arith.cmpi ne, %47, %c0_i32_18 : i32
    scf.if %48 {
      %cst_37 = arith.constant 0.000000e+00 : bf16
      %70 = vector.broadcast %cst_37 : bf16 to vector<2x128xbf16>
      %c14_38 = arith.constant 14 : index
      %c0_39 = arith.constant 0 : index
      %71 = vector.load %arg8[%c14_38, %c0_39] : memref<96x128xbf16, #tpu.memory_space<vmem>>, vector<2x128xbf16>
      tpu.vector_store %arg8[%c14_38, %c0_39], %70 {strides = array<i32>} : memref<96x128xbf16, #tpu.memory_space<vmem>>, vector<2x128xbf16>,
    } else {
    }
    %c1_i32 = arith.constant 1 : i32
    %49 = arith.cmpi slt, %arg1, %c1_i32 : i32
    %50 = arith.extui %49 : i1 to i32
    %c0_i32_19 = arith.constant 0 : i32
    %51 = arith.cmpi ne, %50, %c0_i32_19 : i32
    scf.if %51 {
      %c0_37 = arith.constant 0 : index
      %c0_38 = arith.constant 0 : index
      %c0_39 = arith.constant 0 : index
      %70 = vector.load %arg4[%c0_37, %c0_38, %c0_39] : memref<1x8x128xf32, #tpu.memory_space<vmem>>, vector<1x2x128xf32>
      %71 = vector.shape_cast %70 : vector<1x2x128xf32> to vector<2x128xf32>
      %cst_40 = arith.constant 5.000000e-01 : f32
      %72 = vector.broadcast %cst_40 : f32 to vector<2x128xf32>
      %73 = arith.mulf %72, %71 : vector<2x128xf32>
      %cst_41 = arith.constant 0.707106769 : f32
      %74 = vector.broadcast %cst_41 : f32 to vector<2x128xf32>
      %75 = arith.mulf %71, %74 : vector<2x128xf32>
      %76 = math.absf %75 : vector<2x128xf32>
      %cst_42 = arith.constant 0.327591091 : f32
      %77 = vector.broadcast %cst_42 : f32 to vector<2x128xf32>
      %78 = arith.mulf %77, %76 : vector<2x128xf32>
      %cst_43 = arith.constant 1.000000e+00 : f32
      %79 = vector.broadcast %cst_43 : f32 to vector<2x128xf32>
      %80 = arith.addf %79, %78 : vector<2x128xf32>
      %81 = tpu.reciprocal %80 {approx = true} : vector<2x128xf32> -> vector<2x128xf32>
      %cst_44 = arith.constant 1.06140542 : f32
      %82 = vector.broadcast %cst_44 : f32 to vector<2x128xf32>
      %83 = arith.mulf %82, %81 : vector<2x128xf32>
      %cst_45 = arith.constant -1.45315206 : f32
      %84 = vector.broadcast %cst_45 : f32 to vector<2x128xf32>
      %85 = arith.addf %83, %84 : vector<2x128xf32>
      %86 = arith.mulf %85, %81 : vector<2x128xf32>
      %cst_46 = arith.constant 1.42141378 : f32
      %87 = vector.broadcast %cst_46 : f32 to vector<2x128xf32>
      %88 = arith.addf %86, %87 : vector<2x128xf32>
      %89 = arith.mulf %88, %81 : vector<2x128xf32>
      %cst_47 = arith.constant -0.284496725 : f32
      %90 = vector.broadcast %cst_47 : f32 to vector<2x128xf32>
      %91 = arith.addf %89, %90 : vector<2x128xf32>
      %92 = arith.mulf %91, %81 : vector<2x128xf32>
      %cst_48 = arith.constant 0.254829586 : f32
      %93 = vector.broadcast %cst_48 : f32 to vector<2x128xf32>
      %94 = arith.addf %92, %93 : vector<2x128xf32>
      %95 = arith.mulf %94, %81 : vector<2x128xf32>
      %cst_49 = arith.constant 0.000000e+00 : f32
      %96 = vector.broadcast %cst_49 : f32 to vector<2x128xf32>
      %97 = arith.subf %96, %76 : vector<2x128xf32>
      %98 = arith.mulf %97, %76 : vector<2x128xf32>
      %99 = math.exp %98 : vector<2x128xf32>
      %100 = arith.mulf %95, %99 : vector<2x128xf32>
      %cst_50 = arith.constant 1.000000e+00 : f32
      %101 = vector.broadcast %cst_50 : f32 to vector<2x128xf32>
      %102 = arith.subf %101, %100 : vector<2x128xf32>
      %cst_51 = arith.constant 0.000000e+00 : f32
      %103 = vector.broadcast %cst_51 : f32 to vector<2x128xf32>
      %104 = arith.cmpf oge, %75, %103 : vector<2x128xf32>
      %cst_52 = arith.constant 0.000000e+00 : f32
      %105 = vector.broadcast %cst_52 : f32 to vector<2x128xf32>
      %106 = arith.subf %105, %102 : vector<2x128xf32>
      %107 = arith.select %104, %102, %106 : vector<2x128xi1>, vector<2x128xf32>
      %cst_53 = arith.constant 1.000000e+00 : f32
      %108 = vector.broadcast %cst_53 : f32 to vector<2x128xf32>
      %109 = arith.addf %108, %107 : vector<2x128xf32>
      %110 = arith.mulf %73, %109 : vector<2x128xf32>
      %111 = arith.truncf %110 : vector<2x128xf32> to vector<2x128xbf16>
      %c80 = arith.constant 80 : index
      %c0_54 = arith.constant 0 : index
      %112 = vector.load %arg8[%c80, %c0_54] : memref<96x128xbf16, #tpu.memory_space<vmem>>, vector<2x128xbf16>
      tpu.vector_store %arg8[%c80, %c0_54], %111 {strides = array<i32>} : memref<96x128xbf16, #tpu.memory_space<vmem>>, vector<2x128xbf16>,
    } else {
    }
    %c1_i32_20 = arith.constant 1 : i32
    %52 = arith.cmpi eq, %arg1, %c1_i32_20 : i32
    %53 = arith.extui %52 : i1 to i32
    %c0_i32_21 = arith.constant 0 : i32
    %54 = arith.cmpi ne, %53, %c0_i32_21 : i32
    scf.if %54 {
      %cst_37 = arith.constant 0.000000e+00 : bf16
      %70 = vector.broadcast %cst_37 : bf16 to vector<2x128xbf16>
      %c80 = arith.constant 80 : index
      %c0_38 = arith.constant 0 : index
      %71 = vector.load %arg8[%c80, %c0_38] : memref<96x128xbf16, #tpu.memory_space<vmem>>, vector<2x128xbf16>
      tpu.vector_store %arg8[%c80, %c0_38], %70 {strides = array<i32>} : memref<96x128xbf16, #tpu.memory_space<vmem>>, vector<2x128xbf16>,
    } else {
    }
    %c14 = arith.constant 14 : index
    %c0_22 = arith.constant 0 : index
    %55 = vector.load %arg8[%c14, %c0_22] : memref<96x128xbf16, #tpu.memory_space<vmem>>, vector<64x128xbf16>
    %c16_23 = arith.constant 16 : index
    %c0_24 = arith.constant 0 : index
    %56 = vector.load %arg8[%c16_23, %c0_24] : memref<96x128xbf16, #tpu.memory_space<vmem>>, vector<64x128xbf16>
    %c18 = arith.constant 18 : index
    %c0_25 = arith.constant 0 : index
    %57 = vector.load %arg8[%c18, %c0_25] : memref<96x128xbf16, #tpu.memory_space<vmem>>, vector<64x128xbf16>
    %58 = tpu.concatenate %55, %56, %57 in 1 : vector<64x128xbf16>, vector<64x128xbf16>, vector<64x128xbf16> -> vector<64x384xbf16>
    %c0_26 = arith.constant 0 : index
    %c0_27 = arith.constant 0 : index
    %59 = vector.load %arg5[%c0_26, %c0_27] : memref<384x128xbf16, #tpu.memory_space<vmem>>, vector<384x128xbf16>
    %cst_28 = arith.constant dense<0.000000e+00> : vector<64x128xf32>
    %60 = tpu.matmul %58, %59, %cst_28 {dimension_numbers = #tpu.dot_dimension_numbers<[1], [0], [0], [1], [0, 0, 1, 1], [], []>} : vector<64x384xbf16>, vector<384x128xbf16>, vector<64x128xf32> -> vector<64x128xf32>
    %c0_29 = arith.constant 0 : index
    %c0_30 = arith.constant 0 : index
    %61 = vector.load %arg6[%c0_29, %c0_30] : memref<1x128xf32, #tpu.memory_space<vmem>>, vector<1x128xf32>
    %62 = vector.broadcast %61 : vector<1x128xf32> to vector<64x128xf32>
    %63 = arith.addf %60, %62 : vector<64x128xf32>
    %c0_31 = arith.constant 0 : index
    %c0_32 = arith.constant 0 : index
    %c0_33 = arith.constant 0 : index
    %64 = vector.load %arg2[%c0_31, %c0_32, %c0_33] : memref<1x64x128xf32, #tpu.memory_space<vmem>>, vector<1x64x128xf32>
    %65 = vector.shape_cast %64 : vector<1x64x128xf32> to vector<64x128xf32>
    %66 = arith.addf %63, %65 : vector<64x128xf32>
    %c0_34 = arith.constant 0 : index
    %c0_35 = arith.constant 0 : index
    %c0_36 = arith.constant 0 : index
    %67 = vector.load %arg7[%c0_34, %c0_35, %c0_36] : memref<1x64x128xf32, #tpu.memory_space<vmem>>, vector<1x64x128xf32>
    %68 = vector.shape_cast %67 : vector<1x64x128xf32> to vector<64x128xf32>
    %69 = vector.shape_cast %66 : vector<64x128xf32> to vector<1x64x128xf32>
    tpu.vector_store %arg7[%c0_34, %c0_35, %c0_36], %69 {strides = array<i32>} : memref<1x64x128xf32, #tpu.memory_space<vmem>>, vector<1x64x128xf32>,
    return
  }
  func.func @transform_0(%arg0: i32, %arg1: i32) -> (i32, i32, i32) {
    %c0_i32 = arith.constant 0 : i32
    %c0_i32_0 = arith.constant 0 : i32
    return %arg0, %arg1, %c0_i32 : i32, i32, i32
  }
  func.func @transform_1(%arg0: i32, %arg1: i32) -> (i32, i32, i32) {
    %c8_i32 = arith.constant 8 : i32
    %0 = arith.muli %arg1, %c8_i32 : i32
    %c1_i32 = arith.constant 1 : i32
    %1 = arith.subi %0, %c1_i32 : i32
    %c0_i32 = arith.constant 0 : i32
    %2 = arith.maxsi %1, %c0_i32 : i32
    %c0_i32_0 = arith.constant 0 : i32
    %c0_i32_1 = arith.constant 0 : i32
    return %arg0, %2, %c0_i32_0 : i32, i32, i32
  }
  func.func @transform_2(%arg0: i32, %arg1: i32) -> (i32, i32, i32) {
    %c1_i32 = arith.constant 1 : i32
    %0 = arith.addi %arg1, %c1_i32 : i32
    %c8_i32 = arith.constant 8 : i32
    %1 = arith.muli %0, %c8_i32 : i32
    %c15_i32 = arith.constant 15 : i32
    %2 = arith.minsi %1, %c15_i32 : i32
    %c0_i32 = arith.constant 0 : i32
    %c0_i32_0 = arith.constant 0 : i32
    return %arg0, %2, %c0_i32 : i32, i32, i32
  }
  func.func @transform_3(%arg0: i32, %arg1: i32) -> (i32, i32) {
    %c0_i32 = arith.constant 0 : i32
    %c0_i32_0 = arith.constant 0 : i32
    %c0_i32_1 = arith.constant 0 : i32
    return %c0_i32, %c0_i32_0 : i32, i32
  }
  func.func @transform_4(%arg0: i32, %arg1: i32) -> (i32, i32) {
    %c0_i32 = arith.constant 0 : i32
    %c0_i32_0 = arith.constant 0 : i32
    %c0_i32_1 = arith.constant 0 : i32
    return %c0_i32, %c0_i32_0 : i32, i32
  }
  func.func @transform_5(%arg0: i32, %arg1: i32) -> (i32, i32, i32) {
    %c0_i32 = arith.constant 0 : i32
    %c0_i32_0 = arith.constant 0 : i32
    return %arg0, %arg1, %c0_i32 : i32, i32, i32
  }
}

</mosaic_0001>

<llo_original>
// kernel: fwd.1
$region0: #{fwd.1}
  #allocation0 [shape = 'u32[]', space=smem, size = 0x4, offset = 0x4, fixed_abs, tag = 'smem constant byte address 0x4 - core index']
  #allocation1 [shape = 'u32[72,128]{1,0:T(1,128)}', space=vmem, size = 0x9000, scoped, tag = 'internal scratch']
  #allocation2 [shape = 'bf16[96,128]{1,0:T(8,128)(2,1)}', space=vmem, size = 0x6000, scoped, tag = 'scratch operand']
  %s0 = inlined_call_operand.hbm [shape: f32[2,128,128], index: 0, kind: input, shape index: {}, may-alias: {0,1,2}]
  %s1 = inlined_call_operand.hbm [shape: f32[2,128,128], index: 1, kind: input, shape index: {}, may-alias: {0,1,2}]
  %s2 = inlined_call_operand.hbm [shape: f32[2,128,128], index: 2, kind: input, shape index: {}, may-alias: {0,1,2}]
  %s3 = inlined_call_operand.hbm [shape: bf16[384,128], index: 3, kind: input, shape index: {}]
  %s4 = inlined_call_operand.vmem [shape: f32[1,128], index: 4, kind: input, shape index: {}]
  %s5 = inlined_call_operand.hbm [shape: f32[2,128,128], index: 5, kind: output, shape index: {}]
  %s6 = sld [smem:[#allocation0]]
  $region85: #{fwd.1} parent=0
    _
  %s8 = ssub.s32 1, %s6
  %s9 = scalar_select 0, %s8, %s6
  $region1: #{fwd.1} parent=0
    #allocation3 [shape = 'u8[65536]{0}', space=vmem, size = 0x10000, scoped, tag = 'input window, operand 0']
    #allocation4 [shape = 's32[2]{0}', space=sflag, size = 0x8, scoped, tag = 'scoped memory for fwd.1']
    #allocation5 [shape = 's32[2]{0}', space=sflag, size = 0x8, scoped, tag = 'scoped memory for fwd.1']
    #allocation6 [shape = 'u8[8192]{0}', space=vmem, size = 0x2000, scoped, tag = 'input window, operand 1']
    #allocation7 [shape = 's32[2]{0}', space=sflag, size = 0x8, scoped, tag = 'scoped memory for fwd.1']
    #allocation8 [shape = 'u8[8192]{0}', space=vmem, size = 0x2000, scoped, tag = 'input window, operand 2']
    #allocation9 [shape = 'u8[98304]{0}', space=vmem, size = 0x18000, scoped, tag = 'input window, operand 3, single buffered']
    #allocation10 [shape = 's32[1]{0}', space=sflag, size = 0x4, scoped, tag = 'scoped memory for fwd.1']
    #allocation11 [shape = 'u8[65536]{0}', space=vmem, size = 0x10000, scoped, tag = 'output window, operand 0']
    %10 = vsyncpa [#allocation4], 0
    %s11 = scalar_lea.sflag [#allocation4], 1
    %12 = vsyncpa %s11, 0
    %13 = vsyncpa [#allocation7], 0
    %s14 = scalar_lea.sflag [#allocation7], 1
    %15 = vsyncpa %s14, 0
    %16 = vsyncpa [#allocation10], 0
    %17 = vsyncpa [#allocation5], 0
    %s18 = scalar_lea.sflag [#allocation5], 1
    %19 = vsyncpa %s18, 0
    loop: start=0, step=1, limit=6
    $region2: #{fwd.1} parent=1 // loop_pre_header
      _
    $region3: #{fwd.1} parent=1 // loop_header
      %s21 = sphi 0, %s25
      %p22 = scmp.ge.s32.totalorder %s21, 6
      %s28 = sphi 0, %s40
      %s29 = sphi 0, %s36
      %s30 = sphi 0, %s28
      %s31 = sphi 0, %s29
      %s32 = sphi 0, %s30
      %s33 = sphi 0, %s31
      %s45 = sphi 0, %s47
      %s48 = sphi 0, %s45
      %s49 = sphi 0, %s48
      %s65 = sphi 0, %s49
      %s81 = sphi 0, %s83
      %s84 = sphi 0, %s81
      %s85 = sphi 0, %s84
      %s101 = sphi 0, %s85
      %s117 = sphi 0, %s119
      %s120 = sphi 0, %s117
      %s121 = sphi 0, %s120
      %s137 = sphi 0, %s121
      %s141 = sphi 0, %s141
      %s143 = sphi 0, %s141
      %s144 = sphi 0, %s143
      %s158 = sphi 0, %s144
      %s162 = sphi 0, %s162
      %s164 = sphi 0, %s162
      %s165 = sphi 0, %s164
      %s179 = sphi 0, %s165
      %s187 = sphi 0, %s189
      %s190 = sphi 0, %s187
      %s191 = sphi 0, %s190
      %s207 = sphi 0, %s191
    $region4: #{fwd.1} parent=1 // loop_header_branch
      %24 = sbr.rel (%p22) target = $region8
    $region5: #{fwd.1} parent=1 // loop_body
      %s26 = ssub.s32 %s21, 1
      %s27 = ssub.s32 %s21, 2
      %s34 = sadd.s32 1, %s29
      %p35 = scmp.ge.s32.totalorder %s34, 2
      %s36 = scalar_select %p35, 0, %s34
      %s37 = sadd.s32 1, %s28
      %s38 = scalar_select %p35, %s37, %s28
      %p39 = scmp.ge.s32.totalorder %s38, 2
      %s40 = scalar_select %p39, 0, %s38
      %s41 = ssub.s32 %s28, %s40
      %s42 = ssub.s32 %s29, %s36
      %s43 = sor.u32 %s41, %s42
      %p44 = scmp.eq.s32.totalorder %s43, 0
      %s46 = sadd.s32 %s45, 1
      %s47 = scalar_select %p44, %s45, %s46
      %p50 = pneg %p44
      %p51 = scmp.eq.s32.totalorder %s21, 3
      %p52 = por %p50, %p51
      %p53 = scmp.ne.s32.totalorder %s45, %s48
      %p54 = scmp.eq.s32.totalorder %s21, 0
      %p55 = por %p53, %p54
      %p56 = scmp.ne.s32.totalorder %s45, %s48
      %p57 = scmp.eq.s32.totalorder %s26, 3
      %p58 = por %p56, %p57
      %p59 = scmp.ne.s32.totalorder %s48, %s49
      %p60 = scmp.eq.s32.totalorder %s26, 0
      %p61 = por %p59, %p60
      %p62 = scmp.ne.s32.totalorder %s48, %s49
      %p63 = scmp.eq.s32.totalorder %s27, 3
      %p64 = por %p62, %p63
      %p66 = scmp.ne.s32.totalorder %s49, %s65
      %p67 = scmp.eq.s32.totalorder %s27, 0
      %p68 = por %p66, %p67
      %s69 = smul.u32 %s29, 8
      %s70 = ssub.s32 %s69, 1
      %p71 = scmp.gt.s32.totalorder %s70, 0
      %s72 = scalar_select %p71, %s70, 0
      %s73 = smul.u32 %s36, 8
      %s74 = ssub.s32 %s73, 1
      %p75 = scmp.gt.s32.totalorder %s74, 0
      %s76 = scalar_select %p75, %s74, 0
      %s77 = ssub.s32 %s28, %s40
      %s78 = ssub.s32 %s72, %s76
      %s79 = sor.u32 %s77, %s78
      %p80 = scmp.eq.s32.totalorder %s79, 0
      %s82 = sadd.s32 %s81, 1
      %s83 = scalar_select %p80, %s81, %s82
      %p86 = pneg %p80
      %p87 = scmp.eq.s32.totalorder %s21, 3
      %p88 = por %p86, %p87
      %p89 = scmp.ne.s32.totalorder %s81, %s84
      %p90 = scmp.eq.s32.totalorder %s21, 0
      %p91 = por %p89, %p90
      %p92 = scmp.ne.s32.totalorder %s81, %s84
      %p93 = scmp.eq.s32.totalorder %s26, 3
      %p94 = por %p92, %p93
      %p95 = scmp.ne.s32.totalorder %s84, %s85
      %p96 = scmp.eq.s32.totalorder %s26, 0
      %p97 = por %p95, %p96
      %p98 = scmp.ne.s32.totalorder %s84, %s85
      %p99 = scmp.eq.s32.totalorder %s27, 3
      %p100 = por %p98, %p99
      %p102 = scmp.ne.s32.totalorder %s85, %s101
      %p103 = scmp.eq.s32.totalorder %s27, 0
      %p104 = por %p102, %p103
      %s105 = sadd.s32 %s29, 1
      %s106 = smul.u32 %s105, 8
      %p107 = scmp.lt.s32.totalorder %s106, 15
      %s108 = scalar_select %p107, %s106, 15
      %s109 = sadd.s32 %s36, 1
      %s110 = smul.u32 %s109, 8
      %p111 = scmp.lt.s32.totalorder %s110, 15
      %s112 = scalar_select %p111, %s110, 15
      %s113 = ssub.s32 %s28, %s40
      %s114 = ssub.s32 %s108, %s112
      %s115 = sor.u32 %s113, %s114
      %p116 = scmp.eq.s32.totalorder %s115, 0
      %s118 = sadd.s32 %s117, 1
      %s119 = scalar_select %p116, %s117, %s118
      %p122 = pneg %p116
      %p123 = scmp.eq.s32.totalorder %s21, 3
      %p124 = por %p122, %p123
      %p125 = scmp.ne.s32.totalorder %s117, %s120
      %p126 = scmp.eq.s32.totalorder %s21, 0
      %p127 = por %p125, %p126
      %p128 = scmp.ne.s32.totalorder %s117, %s120
      %p129 = scmp.eq.s32.totalorder %s26, 3
      %p130 = por %p128, %p129
      %p131 = scmp.ne.s32.totalorder %s120, %s121
      %p132 = scmp.eq.s32.totalorder %s26, 0
      %p133 = por %p131, %p132
      %p134 = scmp.ne.s32.totalorder %s120, %s121
      %p135 = scmp.eq.s32.totalorder %s27, 3
      %p136 = por %p134, %p135
      %p138 = scmp.ne.s32.totalorder %s121, %s137
      %p139 = scmp.eq.s32.totalorder %s27, 0
      %p140 = por %p138, %p139
      %s142 = sadd.s32 %s141, 1
      %p145 = scmp.eq.s32.totalorder %s21, 3
      %p146 = scmp.ne.s32.totalorder %s141, %s143
      %p147 = scmp.eq.s32.totalorder %s21, 0
      %p148 = por %p146, %p147
      %p149 = scmp.ne.s32.totalorder %s141, %s143
      %p150 = scmp.eq.s32.totalorder %s26, 3
      %p151 = por %p149, %p150
      %p152 = scmp.ne.s32.totalorder %s143, %s144
      %p153 = scmp.eq.s32.totalorder %s26, 0
      %p154 = por %p152, %p153
      %p155 = scmp.ne.s32.totalorder %s143, %s144
      %p156 = scmp.eq.s32.totalorder %s27, 3
      %p157 = por %p155, %p156
      %p159 = scmp.ne.s32.totalorder %s144, %s158
      %p160 = scmp.eq.s32.totalorder %s27, 0
      %p161 = por %p159, %p160
      %s163 = sadd.s32 %s162, 1
      %p166 = scmp.eq.s32.totalorder %s21, 3
      %p167 = scmp.ne.s32.totalorder %s162, %s164
      %p168 = scmp.eq.s32.totalorder %s21, 0
      %p169 = por %p167, %p168
      %p170 = scmp.ne.s32.totalorder %s162, %s164
      %p171 = scmp.eq.s32.totalorder %s26, 3
      %p172 = por %p170, %p171
      %p173 = scmp.ne.s32.totalorder %s164, %s165
      %p174 = scmp.eq.s32.totalorder %s26, 0
      %p175 = por %p173, %p174
      %p176 = scmp.ne.s32.totalorder %s164, %s165
      %p177 = scmp.eq.s32.totalorder %s27, 3
      %p178 = por %p176, %p177
      %p180 = scmp.ne.s32.totalorder %s165, %s179
      %p181 = scmp.eq.s32.totalorder %s27, 0
      %p182 = por %p180, %p181
      %s183 = ssub.s32 %s28, %s40
      %s184 = ssub.s32 %s29, %s36
      %s185 = sor.u32 %s183, %s184
      %p186 = scmp.eq.s32.totalorder %s185, 0
      %s188 = sadd.s32 %s187, 1
      %s189 = scalar_select %p186, %s187, %s188
      %p192 = pneg %p186
      %p193 = scmp.eq.s32.totalorder %s21, 3
      %p194 = por %p192, %p193
      %p195 = scmp.ne.s32.totalorder %s187, %s190
      %p196 = scmp.eq.s32.totalorder %s21, 0
      %p197 = por %p195, %p196
      %p198 = scmp.ne.s32.totalorder %s187, %s190
      %p199 = scmp.eq.s32.totalorder %s26, 3
      %p200 = por %p198, %p199
      %p201 = scmp.ne.s32.totalorder %s190, %s191
      %p202 = scmp.eq.s32.totalorder %s26, 0
      %p203 = por %p201, %p202
      %p204 = scmp.ne.s32.totalorder %s190, %s191
      %p205 = scmp.eq.s32.totalorder %s27, 3
      %p206 = por %p204, %p205
      %p208 = scmp.ne.s32.totalorder %s191, %s207
      %p209 = scmp.eq.s32.totalorder %s27, 0
      %p210 = por %p208, %p209
      %p211 = scmp.le.s32.totalorder 1, %s21
      %p212 = scmp.lt.s32.totalorder %s21, 5
      %p213 = pnand %p211, %p212
      %p214 = pneg %p213
      // Predicated region
      $region9: #{fwd.1} parent=5 // pred_check
        _
      $region10: #{fwd.1} parent=5 // pred_check_branch
        %216 = sbr.rel (%p213) target = $region12
      $region11: #{fwd.1} parent=5 // pred_region
        %s217 = ssub.s32 %s21, 1
        // Predicated region
        $region13: #{fwd.1} parent=11 // pred_check
          %p218 = pneg %p154
        $region14: #{fwd.1} parent=11 // pred_check_branch
          %220 = sbr.rel (%p218) target = $region16
        $region15: #{fwd.1} parent=11 // pred_region
          %222 = vsyncadd [#allocation10], 0
          %s223 = sshll.u32 %s3, 4
          %s224 = int_to_ptr.hbm [resolvable:$true] %s223
          %s225 = sshll.u32 [#allocation9], 4
          %s226 = int_to_ptr.vmem [resolvable:$true] %s225
          %231 = dma.hbm_to_vmem [thread:$0]  %s224, 3072, %s226, [#allocation10], 64, 64, 4
        $region16: #{fwd.1} parent=11 // pred_fallthru
          _
        // Predicated region
        $region17: #{fwd.1} parent=11 // pred_check
          %p232 = pneg %p175
        $region18: #{fwd.1} parent=11 // pred_check_branch
          %234 = sbr.rel (%p232) target = $region20
        $region19: #{fwd.1} parent=11 // pred_region
          _
        $region20: #{fwd.1} parent=11 // pred_fallthru
          _
      $region12: #{fwd.1} parent=5 // pred_fallthru
        _
      %p235 = scmp.lt.s32.totalorder %s21, 4
      // Predicated region
      $region21: #{fwd.1} parent=5 // pred_check
        %p236 = pneg %p235
      $region22: #{fwd.1} parent=5 // pred_check_branch
        %238 = sbr.rel (%p236) target = $region24
      $region23: #{fwd.1} parent=5 // pred_region
        // Predicated region
        $region25: #{fwd.1} parent=23 // pred_check
          %p239 = pneg %p55
        $region26: #{fwd.1} parent=23 // pred_check_branch
          %241 = sbr.rel (%p239) target = $region28
        $region27: #{fwd.1} parent=23 // pred_region
          %s242 = sand.u32 %s45, 1
          %s243 = scalar_lea.sflag [#allocation4], %s242
          %s244 = sand.u32 %s45, 1
          %s245 = smul.addr %s244, 64
          %s246 = scalar_lea.vmem [#allocation3], %s245
          %s247 = smul.u32 8, %s29
          %249 = vsyncadd %s243, 0
          %s250 = smul.addr %s28, 16
          %s251 = sadd.s32 %s247, %s250
          %s252 = smul.addr %s251, 8
          %s253 = scalar_lea.hbm %s0, %s252
          %s254 = sshll.u32 %s253, 4
          %s255 = int_to_ptr.hbm [resolvable:$true] %s254
          %s256 = sshll.u32 %s246, 4
          %s257 = int_to_ptr.vmem [resolvable:$true] %s256
          %262 = dma.hbm_to_vmem [thread:$0]  %s255, 1024, %s257, %s243, 128, 128, 8
        $region28: #{fwd.1} parent=23 // pred_fallthru
          _
        // Predicated region
        $region29: #{fwd.1} parent=23 // pred_check
          %p263 = pneg %p91
        $region30: #{fwd.1} parent=23 // pred_check_branch
          %265 = sbr.rel (%p263) target = $region32
        $region31: #{fwd.1} parent=23 // pred_region
          %s266 = sand.u32 %s21, 1
          %s267 = scalar_lea.sflag [#allocation7], %s266
          %s268 = sand.u32 %s81, 1
          %s269 = smul.addr %s268, 8
          %s270 = scalar_lea.vmem [#allocation6], %s269
          %s271 = smul.u32 %s29, 8
          %s272 = ssub.s32 %s271, 1
          %p273 = scmp.gt.s32.totalorder %s272, 0
          %s274 = scalar_select %p273, %s272, 0
          %276 = vsyncadd %s267, 0
          %s277 = smul.addr %s28, 16
          %s278 = sadd.s32 %s274, %s277
          %s279 = smul.addr %s278, 8
          %s280 = scalar_lea.hbm %s1, %s279
          %s282 = sshll.u32 %s280, 4
          %s283 = int_to_ptr.hbm [resolvable:$true] %s282
          %s284 = sshll.u32 %s270, 4
          %s285 = int_to_ptr.vmem [resolvable:$true] %s284
          %287 = dma.hbm_to_vmem [thread:$0]  %s283, 128, %s285, %s267
        $region32: #{fwd.1} parent=23 // pred_fallthru
          _
        // Predicated region
        $region33: #{fwd.1} parent=23 // pred_check
          %p288 = pneg %p127
        $region34: #{fwd.1} parent=23 // pred_check_branch
          %290 = sbr.rel (%p288) target = $region36
        $region35: #{fwd.1} parent=23 // pred_region
          %s291 = sand.u32 %s21, 1
          %s292 = scalar_lea.sflag [#allocation7], %s291
          %s293 = sand.u32 %s117, 1
          %s294 = smul.addr %s293, 8
          %s295 = scalar_lea.vmem [#allocation8], %s294
          %s296 = sadd.s32 %s29, 1
          %s297 = smul.u32 %s296, 8
          %p298 = scmp.lt.s32.totalorder %s297, 15
          %s299 = scalar_select %p298, %s297, 15
          %301 = vsyncadd %s292, 0
          %s302 = smul.addr %s28, 16
          %s303 = sadd.s32 %s299, %s302
          %s304 = smul.addr %s303, 8
          %s305 = scalar_lea.hbm %s2, %s304
          %s307 = sshll.u32 %s305, 4
          %s308 = int_to_ptr.hbm [resolvable:$true] %s307
          %s309 = sshll.u32 %s295, 4
          %s310 = int_to_ptr.vmem [resolvable:$true] %s309
          %312 = dma.hbm_to_vmem [thread:$0]  %s308, 128, %s310, %s292
        $region36: #{fwd.1} parent=23 // pred_fallthru
          _
      $region24: #{fwd.1} parent=5 // pred_fallthru
        _
      %p313 = scmp.le.s32.totalorder 1, %s21
      %p314 = scmp.lt.s32.totalorder %s21, 5
      %p315 = pnand %p313, %p314
      %p316 = pneg %p315
      // Predicated region
      $region37: #{fwd.1} parent=5 // pred_check
        _
      $region38: #{fwd.1} parent=5 // pred_check_branch
        %318 = sbr.rel (%p315) target = $region40
      $region39: #{fwd.1} parent=5 // pred_region
        %s319 = ssub.s32 %s21, 1
        %s320 = sand.u32 %s48, 1
        %s321 = scalar_lea.sflag [#allocation4], %s320
        %s322 = sand.u32 %s48, 1
        %s323 = smul.addr %s322, 64
        %s324 = scalar_lea.vmem [#allocation3], %s323
        // Predicated region
        $region41: #{fwd.1} parent=39 // pred_check
          %p325 = pneg %p61
        $region42: #{fwd.1} parent=39 // pred_check_branch
          %327 = sbr.rel (%p325) target = $region44
        $region43: #{fwd.1} parent=39 // pred_region
          %329 = dma.done %s321, 1024
        $region44: #{fwd.1} parent=39 // pred_fallthru
          _
        %s330 = sand.u32 %s26, 1
        %s331 = scalar_lea.sflag [#allocation7], %s330
        %s332 = sand.u32 %s84, 1
        %s333 = smul.addr %s332, 8
        %s334 = scalar_lea.vmem [#allocation6], %s333
        // Predicated region
        $region45: #{fwd.1} parent=39 // pred_check
          %p335 = pneg %p97
        $region46: #{fwd.1} parent=39 // pred_check_branch
          %337 = sbr.rel (%p335) target = $region48
        $region47: #{fwd.1} parent=39 // pred_region
          %339 = dma.done %s331, 128
        $region48: #{fwd.1} parent=39 // pred_fallthru
          _
        %s340 = sand.u32 %s26, 1
        %s341 = scalar_lea.sflag [#allocation7], %s340
        %s342 = sand.u32 %s120, 1
        %s343 = smul.addr %s342, 8
        %s344 = scalar_lea.vmem [#allocation8], %s343
        // Predicated region
        $region49: #{fwd.1} parent=39 // pred_check
          %p345 = pneg %p133
        $region50: #{fwd.1} parent=39 // pred_check_branch
          %347 = sbr.rel (%p345) target = $region52
        $region51: #{fwd.1} parent=39 // pred_region
          %349 = dma.done %s341, 128
        $region52: #{fwd.1} parent=39 // pred_fallthru
          _
        // Predicated region
        $region53: #{fwd.1} parent=39 // pred_check
          %p350 = pneg %p154
        $region54: #{fwd.1} parent=39 // pred_check_branch
          %352 = sbr.rel (%p350) target = $region56
        $region55: #{fwd.1} parent=39 // pred_region
          %354 = dma.done [#allocation10], 3072
        $region56: #{fwd.1} parent=39 // pred_fallthru
          _
        %s355 = sand.u32 %s48, 1
        %s356 = scalar_lea.sflag [#allocation4], %s355
        %s357 = sand.u32 %s48, 1
        %s358 = smul.addr %s357, 64
        %s359 = scalar_lea.vmem [#allocation3], %s358
        %p360 = pneg %p61
        %p361 = pneg %p58
        %s362 = sand.u32 %s26, 1
        %s363 = scalar_lea.sflag [#allocation7], %s362
        %s364 = sand.u32 %s84, 1
        %s365 = smul.addr %s364, 8
        %s366 = scalar_lea.vmem [#allocation6], %s365
        %p367 = pneg %p97
        %p368 = pneg %p94
        %s369 = sand.u32 %s26, 1
        %s370 = scalar_lea.sflag [#allocation7], %s369
        %s371 = sand.u32 %s120, 1
        %s372 = smul.addr %s371, 8
        %s373 = scalar_lea.vmem [#allocation8], %s372
        %p374 = pneg %p133
        %p375 = pneg %p130
        %p376 = pneg %p154
        %p377 = pneg %p151
        %p378 = pneg %p175
        %p379 = pneg %p172
        %p380 = pneg %p203
        %p381 = pneg %p200
        %s382 = sand.u32 %s190, 1
        %s383 = scalar_lea.sflag [#allocation5], %s382
        %s384 = sand.u32 %s190, 1
        %s385 = smul.addr %s384, 64
        %s386 = scalar_lea.vmem [#allocation11], %s385
        %s387 = smul.u32 8, %s31
        %s388 = smul.u32 %s31, 8
        %s389 = ssub.s32 %s388, 1
        %p390 = scmp.gt.s32.totalorder %s389, 0
        %s391 = scalar_select %p390, %s389, 0
        %s392 = sadd.s32 %s31, 1
        %s393 = smul.u32 %s392, 8
        %p394 = scmp.lt.s32.totalorder %s393, 15
        %s395 = scalar_select %p394, %s393, 15
        %s396 = smul.u32 8, %s31
        %v398 = vld [vmem:[%s324] sm:$0xff]
        %v399 = vld [vmem:[%s324 + $0x8] sm:$0xff]
        %v400 = vld [vmem:[%s324 + $0x10] sm:$0xff]
        %v401 = vld [vmem:[%s324 + $0x18] sm:$0xff]
        %v402 = vld [vmem:[%s324 + $0x20] sm:$0xff]
        %v403 = vld [vmem:[%s324 + $0x28] sm:$0xff]
        %v404 = vld [vmem:[%s324 + $0x30] sm:$0xff]
        %v405 = vld [vmem:[%s324 + $0x38] sm:$0xff]
        %v406 = vmul.f32 %v398, 0.5
        %v407 = vmul.f32 %v399, 0.5
        %v408 = vmul.f32 %v400, 0.5
        %v409 = vmul.f32 %v401, 0.5
        %v410 = vmul.f32 %v402, 0.5
        %v411 = vmul.f32 %v403, 0.5
        %v412 = vmul.f32 %v404, 0.5
        %v413 = vmul.f32 %v405, 0.5
        %v414 = vmul.f32 %v398, 0.70710677
        %v415 = vmul.f32 %v399, 0.70710677
        %v416 = vmul.f32 %v400, 0.70710677
        %v417 = vmul.f32 %v401, 0.70710677
        %v418 = vmul.f32 %v402, 0.70710677
        %v419 = vmul.f32 %v403, 0.70710677
        %v420 = vmul.f32 %v404, 0.70710677
        %v421 = vmul.f32 %v405, 0.70710677
        %v422 = vand.u32 2147483647, %v414
        %v423 = vand.u32 2147483647, %v415
        %v424 = vand.u32 2147483647, %v416
        %v425 = vand.u32 2147483647, %v417
        %v426 = vand.u32 2147483647, %v418
        %v427 = vand.u32 2147483647, %v419
        %v428 = vand.u32 2147483647, %v420
        %v429 = vand.u32 2147483647, %v421
        %v430 = vmul.f32 %v422, 0.3275911
        %v431 = vmul.f32 %v423, 0.3275911
        %v432 = vmul.f32 %v424, 0.3275911
        %v433 = vmul.f32 %v425, 0.3275911
        %v434 = vmul.f32 %v426, 0.3275911
        %v435 = vmul.f32 %v427, 0.3275911
        %v436 = vmul.f32 %v428, 0.3275911
        %v437 = vmul.f32 %v429, 0.3275911
        %v438 = vadd.f32 %v430, 1.0
        %v439 = vadd.f32 %v431, 1.0
        %v440 = vadd.f32 %v432, 1.0
        %v441 = vadd.f32 %v433, 1.0
        %v442 = vadd.f32 %v434, 1.0
        %v443 = vadd.f32 %v435, 1.0
        %v444 = vadd.f32 %v436, 1.0
        %v445 = vadd.f32 %v437, 1.0
        %v446 = vrcp.pop %v438
        %v447 = vrcp.pop %v439
        %v448 = vrcp.pop %v440
        %v449 = vrcp.pop %v441
        %v450 = vrcp.pop %v442
        %v451 = vrcp.pop %v443
        %v452 = vrcp.pop %v444
        %v453 = vrcp.pop %v445
        %v454 = vmul.f32 %v446, 1.0614054
        %v455 = vmul.f32 %v447, 1.0614054
        %v456 = vmul.f32 %v448, 1.0614054
        %v457 = vmul.f32 %v449, 1.0614054
        %v458 = vmul.f32 %v450, 1.0614054
        %v459 = vmul.f32 %v451, 1.0614054
        %v460 = vmul.f32 %v452, 1.0614054
        %v461 = vmul.f32 %v453, 1.0614054
        %v462 = vadd.f32 %v454, -1.4531521
        %v463 = vadd.f32 %v455, -1.4531521
        %v464 = vadd.f32 %v456, -1.4531521
        %v465 = vadd.f32 %v457, -1.4531521
        %v466 = vadd.f32 %v458, -1.4531521
        %v467 = vadd.f32 %v459, -1.4531521
        %v468 = vadd.f32 %v460, -1.4531521
        %v469 = vadd.f32 %v461, -1.4531521
        %v470 = vmul.f32 %v462, %v446
        %v471 = vmul.f32 %v463, %v447
        %v472 = vmul.f32 %v464, %v448
        %v473 = vmul.f32 %v465, %v449
        %v474 = vmul.f32 %v466, %v450
        %v475 = vmul.f32 %v467, %v451
        %v476 = vmul.f32 %v468, %v452
        %v477 = vmul.f32 %v469, %v453
        %v478 = vadd.f32 %v470, 1.4214138
        %v479 = vadd.f32 %v471, 1.4214138
        %v480 = vadd.f32 %v472, 1.4214138
        %v481 = vadd.f32 %v473, 1.4214138
        %v482 = vadd.f32 %v474, 1.4214138
        %v483 = vadd.f32 %v475, 1.4214138
        %v484 = vadd.f32 %v476, 1.4214138
        %v485 = vadd.f32 %v477, 1.4214138
        %v486 = vmul.f32 %v478, %v446
        %v487 = vmul.f32 %v479, %v447
        %v488 = vmul.f32 %v480, %v448
        %v489 = vmul.f32 %v481, %v449
        %v490 = vmul.f32 %v482, %v450
        %v491 = vmul.f32 %v483, %v451
        %v492 = vmul.f32 %v484, %v452
        %v493 = vmul.f32 %v485, %v453
        %v494 = vadd.f32 %v486, -0.28449672
        %v495 = vadd.f32 %v487, -0.28449672
        %v496 = vadd.f32 %v488, -0.28449672
        %v497 = vadd.f32 %v489, -0.28449672
        %v498 = vadd.f32 %v490, -0.28449672
        %v499 = vadd.f32 %v491, -0.28449672
        %v500 = vadd.f32 %v492, -0.28449672
        %v501 = vadd.f32 %v493, -0.28449672
        %v502 = vmul.f32 %v494, %v446
        %v503 = vmul.f32 %v495, %v447
        %v504 = vmul.f32 %v496, %v448
        %v505 = vmul.f32 %v497, %v449
        %v506 = vmul.f32 %v498, %v450
        %v507 = vmul.f32 %v499, %v451
        %v508 = vmul.f32 %v500, %v452
        %v509 = vmul.f32 %v501, %v453
        %v510 = vadd.f32 %v502, 0.2548296
        %v511 = vadd.f32 %v503, 0.2548296
        %v512 = vadd.f32 %v504, 0.2548296
        %v513 = vadd.f32 %v505, 0.2548296
        %v514 = vadd.f32 %v506, 0.2548296
        %v515 = vadd.f32 %v507, 0.2548296
        %v516 = vadd.f32 %v508, 0.2548296
        %v517 = vadd.f32 %v509, 0.2548296
        %v518 = vmul.f32 %v510, %v446
        %v519 = vmul.f32 %v511, %v447
        %v520 = vmul.f32 %v512, %v448
        %v521 = vmul.f32 %v513, %v449
        %v522 = vmul.f32 %v514, %v450
        %v523 = vmul.f32 %v515, %v451
        %v524 = vmul.f32 %v516, %v452
        %v525 = vmul.f32 %v517, %v453
        %v526 = vsub.f32 0.0, %v422
        %v527 = vsub.f32 0.0, %v423
        %v528 = vsub.f32 0.0, %v424
        %v529 = vsub.f32 0.0, %v425
        %v530 = vsub.f32 0.0, %v426
        %v531 = vsub.f32 0.0, %v427
        %v532 = vsub.f32 0.0, %v428
        %v533 = vsub.f32 0.0, %v429
        %v534 = vmul.f32 %v526, %v422
        %v535 = vmul.f32 %v527, %v423
        %v536 = vmul.f32 %v528, %v424
        %v537 = vmul.f32 %v529, %v425
        %v538 = vmul.f32 %v530, %v426
        %v539 = vmul.f32 %v531, %v427
        %v540 = vmul.f32 %v532, %v428
        %v541 = vmul.f32 %v533, %v429
        %v542 = vmul.f32 %v534, 1.442695
        %v543 = vpow.pop %v542
        %v544 = vmul.f32 %v535, 1.442695
        %v545 = vpow.pop %v544
        %v546 = vmul.f32 %v536, 1.442695
        %v547 = vpow.pop %v546
        %v548 = vmul.f32 %v537, 1.442695
        %v549 = vpow.pop %v548
        %v550 = vmul.f32 %v538, 1.442695
        %v551 = vpow.pop %v550
        %v552 = vmul.f32 %v539, 1.442695
        %v553 = vpow.pop %v552
        %v554 = vmul.f32 %v540, 1.442695
        %v555 = vpow.pop %v554
        %v556 = vmul.f32 %v541, 1.442695
        %v557 = vpow.pop %v556
        %v558 = vmul.f32 %v518, %v543
        %v559 = vmul.f32 %v519, %v545
        %v560 = vmul.f32 %v520, %v547
        %v561 = vmul.f32 %v521, %v549
        %v562 = vmul.f32 %v522, %v551
        %v563 = vmul.f32 %v523, %v553
        %v564 = vmul.f32 %v524, %v555
        %v565 = vmul.f32 %v525, %v557
        %v566 = vsub.f32 1.0, %v558
        %v567 = vsub.f32 1.0, %v559
        %v568 = vsub.f32 1.0, %v560
        %v569 = vsub.f32 1.0, %v561
        %v570 = vsub.f32 1.0, %v562
        %v571 = vsub.f32 1.0, %v563
        %v572 = vsub.f32 1.0, %v564
        %v573 = vsub.f32 1.0, %v565
        %vm574 = vcmp.ge.f32.partialorder %v414, 0.0
        %vm575 = vcmp.ge.f32.partialorder %v415, 0.0
        %vm576 = vcmp.ge.f32.partialorder %v416, 0.0
        %vm577 = vcmp.ge.f32.partialorder %v417, 0.0
        %vm578 = vcmp.ge.f32.partialorder %v418, 0.0
        %vm579 = vcmp.ge.f32.partialorder %v419, 0.0
        %vm580 = vcmp.ge.f32.partialorder %v420, 0.0
        %vm581 = vcmp.ge.f32.partialorder %v421, 0.0
        %v582 = vsub.f32 0.0, %v566
        %v583 = vsub.f32 0.0, %v567
        %v584 = vsub.f32 0.0, %v568
        %v585 = vsub.f32 0.0, %v569
        %v586 = vsub.f32 0.0, %v570
        %v587 = vsub.f32 0.0, %v571
        %v588 = vsub.f32 0.0, %v572
        %v589 = vsub.f32 0.0, %v573
        %v590 = vsel %vm574, %v566, %v582
        %v591 = vsel %vm575, %v567, %v583
        %v592 = vsel %vm576, %v568, %v584
        %v593 = vsel %vm577, %v569, %v585
        %v594 = vsel %vm578, %v570, %v586
        %v595 = vsel %vm579, %v571, %v587
        %v596 = vsel %vm580, %v572, %v588
        %v597 = vsel %vm581, %v573, %v589
        %v598 = vadd.f32 %v590, 1.0
        %v599 = vadd.f32 %v591, 1.0
        %v600 = vadd.f32 %v592, 1.0
        %v601 = vadd.f32 %v593, 1.0
        %v602 = vadd.f32 %v594, 1.0
        %v603 = vadd.f32 %v595, 1.0
        %v604 = vadd.f32 %v596, 1.0
        %v605 = vadd.f32 %v597, 1.0
        %v606 = vmul.f32 %v406, %v598
        %v607 = vmul.f32 %v407, %v599
        %v608 = vmul.f32 %v408, %v600
        %v609 = vmul.f32 %v409, %v601
        %v610 = vmul.f32 %v410, %v602
        %v611 = vmul.f32 %v411, %v603
        %v612 = vmul.f32 %v412, %v604
        %v613 = vmul.f32 %v413, %v605
        %v614 = vpack.c.bf16 %v606, %v606
        %v615 = vpack.c.bf16 %v607, %v607
        %v616 = vpack.c.bf16 %v608, %v608
        %v617 = vpack.c.bf16 %v609, %v609
        %v618 = vpack.c.bf16 %v610, %v610
        %v619 = vpack.c.bf16 %v611, %v611
        %v620 = vpack.c.bf16 %v612, %v612
        %v621 = vpack.c.bf16 %v613, %v613
        %622 = vst [vmem:[#allocation2 + $0x8] sm:$0xf] %v614
        %623 = vst [vmem:[#allocation2 + $0xc] sm:$0xf] %v615
        %624 = vst [vmem:[#allocation2 + $0x10] sm:$0xf] %v616
        %625 = vst [vmem:[#allocation2 + $0x14] sm:$0xf] %v617
        %626 = vst [vmem:[#allocation2 + $0x18] sm:$0xf] %v618
        %627 = vst [vmem:[#allocation2 + $0x1c] sm:$0xf] %v619
        %628 = vst [vmem:[#allocation2 + $0x20] sm:$0xf] %v620
        %629 = vst [vmem:[#allocation2 + $0x24] sm:$0xf] %v621
        %p630 = scmp.gt.s32.totalorder %s31, 0
        // Predicated region
        $region57: #{fwd.1} parent=39 // pred_check
          %p631 = pneg %p630
        $region58: #{fwd.1} parent=39 // pred_check_branch
          %633 = sbr.rel (%p631) target = $region60
        $region59: #{fwd.1} parent=39 // pred_region
          %v634 = vld [vmem:[%s334 + $0x6] sm:$0x3]
          %v635 = vmul.f32 %v634, 0.5
          %v636 = vmul.f32 %v634, 0.70710677
          %v637 = vand.u32 2147483647, %v636
          %v638 = vmul.f32 %v637, 0.3275911
          %v639 = vadd.f32 %v638, 1.0
          %v640 = vrcp.pop %v639
          %v641 = vmul.f32 %v640, 1.0614054
          %v642 = vadd.f32 %v641, -1.4531521
          %v643 = vmul.f32 %v642, %v640
          %v644 = vadd.f32 %v643, 1.4214138
          %v645 = vmul.f32 %v644, %v640
          %v646 = vadd.f32 %v645, -0.28449672
          %v647 = vmul.f32 %v646, %v640
          %v648 = vadd.f32 %v647, 0.2548296
          %v649 = vmul.f32 %v648, %v640
          %v650 = vsub.f32 0.0, %v637
          %v651 = vmul.f32 %v650, %v637
          %v652 = vmul.f32 %v651, 1.442695
          %v653 = vpow.pop %v652
          %v654 = vmul.f32 %v649, %v653
          %v655 = vsub.f32 1.0, %v654
          %vm656 = vcmp.ge.f32.partialorder %v636, 0.0
          %v657 = vsub.f32 0.0, %v655
          %v658 = vsel %vm656, %v655, %v657
          %v659 = vadd.f32 %v658, 1.0
          %v660 = vmul.f32 %v635, %v659
          %v661 = vpack.c.bf16 %v660, %v660
          %v663 = vrot.slane %v661, 5
          %665 = vst [vmem:[#allocation2 + $0x4] sm:$0x8] %v663
        $region60: #{fwd.1} parent=39 // pred_fallthru
          _
        %p666 = scmp.eq.s32.totalorder %s31, 0
        // Predicated region
        $region61: #{fwd.1} parent=39 // pred_check
          %p667 = pneg %p666
        $region62: #{fwd.1} parent=39 // pred_check_branch
          %669 = sbr.rel (%p667) target = $region64
        $region63: #{fwd.1} parent=39 // pred_region
          %670 = vst [vmem:[#allocation2 + $0x4] sm:$0x8] 0
        $region64: #{fwd.1} parent=39 // pred_fallthru
          _
        %p671 = scmp.lt.s32.totalorder %s31, 1
        // Predicated region
        $region65: #{fwd.1} parent=39 // pred_check
          %p672 = pneg %p671
        $region66: #{fwd.1} parent=39 // pred_check_branch
          %674 = sbr.rel (%p672) target = $region68
        $region67: #{fwd.1} parent=39 // pred_region
          %v675 = vld [vmem:[%s344] sm:$0x3]
          %v676 = vmul.f32 %v675, 0.5
          %v677 = vmul.f32 %v675, 0.70710677
          %v678 = vand.u32 2147483647, %v677
          %v679 = vmul.f32 %v678, 0.3275911
          %v680 = vadd.f32 %v679, 1.0
          %v681 = vrcp.pop %v680
          %v682 = vmul.f32 %v681, 1.0614054
          %v683 = vadd.f32 %v682, -1.4531521
          %v684 = vmul.f32 %v683, %v681
          %v685 = vadd.f32 %v684, 1.4214138
          %v686 = vmul.f32 %v685, %v681
          %v687 = vadd.f32 %v686, -0.28449672
          %v688 = vmul.f32 %v687, %v681
          %v689 = vadd.f32 %v688, 0.2548296
          %v690 = vmul.f32 %v689, %v681
          %v691 = vsub.f32 0.0, %v678
          %v692 = vmul.f32 %v691, %v678
          %v693 = vmul.f32 %v692, 1.442695
          %v694 = vpow.pop %v693
          %v695 = vmul.f32 %v690, %v694
          %v696 = vsub.f32 1.0, %v695
          %vm697 = vcmp.ge.f32.partialorder %v677, 0.0
          %v698 = vsub.f32 0.0, %v696
          %v699 = vsel %vm697, %v696, %v698
          %v700 = vadd.f32 %v699, 1.0
          %v701 = vmul.f32 %v676, %v700
          %v702 = vpack.c.bf16 %v701, %v701
          %703 = vst [vmem:[#allocation2 + $0x28] sm:$0x1] %v702
        $region68: #{fwd.1} parent=39 // pred_fallthru
          _
        %p704 = scmp.eq.s32.totalorder %s31, 1
        // Predicated region
        $region69: #{fwd.1} parent=39 // pred_check
          %p705 = pneg %p704
        $region70: #{fwd.1} parent=39 // pred_check_branch
          %707 = sbr.rel (%p705) target = $region72
        $region71: #{fwd.1} parent=39 // pred_region
          %708 = vst [vmem:[#allocation2 + $0x28] sm:$0x1] 0
        $region72: #{fwd.1} parent=39 // pred_fallthru
          _
        %v709 = vld [vmem:[#allocation2 + $0x4] sm:$0x8]
        %v710 = vld [vmem:[#allocation2 + $0x8] sm:$0xf]
        %v711 = vld [vmem:[#allocation2 + $0xc] sm:$0xf]
        %v712 = vld [vmem:[#allocation2 + $0x10] sm:$0xf]
        %v713 = vld [vmem:[#allocation2 + $0x14] sm:$0xf]
        %v714 = vld [vmem:[#allocation2 + $0x18] sm:$0xf]
        %v715 = vld [vmem:[#allocation2 + $0x1c] sm:$0xf]
        %v716 = vld [vmem:[#allocation2 + $0x20] sm:$0xf]
        %v717 = vld [vmem:[#allocation2 + $0x24] sm:$0x7]
        %v718 = vld [vmem:[#allocation2 + $0x24] sm:$0xf]
        %v719 = vld [vmem:[#allocation2 + $0x8] sm:$0xe]
        %v720 = vld [vmem:[#allocation2 + $0x28] sm:$0x1]
        %v730 = vunpack.c.l.b16 %v709
        %v731 = vunpack.c.l.b16 %v710
        %v732 = vunpack.c.l.b16 %v711
        %v733 = vunpack.c.l.b16 %v712
        %v734 = vunpack.c.l.b16 %v713
        %v735 = vunpack.c.l.b16 %v714
        %v736 = vunpack.c.l.b16 %v715
        %v737 = vunpack.c.l.b16 %v716
        %v738 = vunpack.c.l.b16 %v717
        %v739 = vpack.c.b16 %v731, %v730
        %v740 = vpack.c.b16 %v733, %v732
        %v741 = vpack.c.b16 %v735, %v734
        %v742 = vpack.c.b16 %v737, %v736
        %v743 = vpack.c.b16 %v738, %v738
        %v745 = vunpack.c.l.b16 %v718
        %v746 = vpack.c.b16 %v732, %v731
        %v747 = vpack.c.b16 %v734, %v733
        %v748 = vpack.c.b16 %v736, %v735
        %v749 = vpack.c.b16 %v745, %v737
        %vm750 = vcmask 1042432
        %v751 = vrot.slane %v746, 5
        %v752 = vrot.slane %v747, 5
        %v753 = vsel %vm750, %v751, %v752
        %v754 = vrot.slane %v748, 5
        %v755 = vsel %vm750, %v752, %v754
        %v756 = vrot.slane %v749, 5
        %v757 = vsel %vm750, %v754, %v756
        %v760 = vunpack.c.l.b16 %v719
        %v761 = vunpack.c.l.b16 %v720
        %v762 = vpack.c.b16 %v732, %v760
        %v763 = vpack.c.b16 %v761, %v761
        %vm764 = vcmask 1041408
        %v765 = vrot.slane %v762, 6
        %v766 = vrot.slane %v747, 6
        %v767 = vsel %vm764, %v765, %v766
        %v768 = vrot.slane %v748, 6
        %v769 = vsel %vm764, %v766, %v768
        %v770 = vrot.slane %v749, 6
        %v771 = vsel %vm764, %v768, %v770
        %v772 = vrot.slane %v763, 6
        %v773 = vsel %vm764, %v770, %v772
        %v774 = vld [vmem:[#allocation9] sm:$0xf]
        %v775 = vld [vmem:[#allocation9 + $0x4] sm:$0xf]
        %v776 = vld [vmem:[#allocation9 + $0x8] sm:$0xf]
        %v777 = vld [vmem:[#allocation9 + $0xc] sm:$0xf]
        %v778 = vld [vmem:[#allocation9 + $0x10] sm:$0xf]
        %v779 = vld [vmem:[#allocation9 + $0x14] sm:$0xf]
        %v780 = vld [vmem:[#allocation9 + $0x18] sm:$0xf]
        %v781 = vld [vmem:[#allocation9 + $0x1c] sm:$0xf]
        %v782 = vld [vmem:[#allocation9 + $0x20] sm:$0xf]
        %v783 = vld [vmem:[#allocation9 + $0x24] sm:$0xf]
        %v784 = vld [vmem:[#allocation9 + $0x28] sm:$0xf]
        %v785 = vld [vmem:[#allocation9 + $0x2c] sm:$0xf]
        %v786 = vld [vmem:[#allocation9 + $0x30] sm:$0xf]
        %v787 = vld [vmem:[#allocation9 + $0x34] sm:$0xf]
        %v788 = vld [vmem:[#allocation9 + $0x38] sm:$0xf]
        %v789 = vld [vmem:[#allocation9 + $0x3c] sm:$0xf]
        %v790 = vld [vmem:[#allocation9 + $0x40] sm:$0xf]
        %v791 = vld [vmem:[#allocation9 + $0x44] sm:$0xf]
        %v792 = vld [vmem:[#allocation9 + $0x48] sm:$0xf]
        %v793 = vld [vmem:[#allocation9 + $0x4c] sm:$0xf]
        %v794 = vld [vmem:[#allocation9 + $0x50] sm:$0xf]
        %v795 = vld [vmem:[#allocation9 + $0x54] sm:$0xf]
        %v796 = vld [vmem:[#allocation9 + $0x58] sm:$0xf]
        %v797 = vld [vmem:[#allocation9 + $0x5c] sm:$0xf]
        %v798 = vld [vmem:[#allocation9 + $0x60] sm:$0xf]
        %v799 = vld [vmem:[#allocation9 + $0x64] sm:$0xf]
        %v800 = vld [vmem:[#allocation9 + $0x68] sm:$0xf]
        %v801 = vld [vmem:[#allocation9 + $0x6c] sm:$0xf]
        %v802 = vld [vmem:[#allocation9 + $0x70] sm:$0xf]
        %v803 = vld [vmem:[#allocation9 + $0x74] sm:$0xf]
        %v804 = vld [vmem:[#allocation9 + $0x78] sm:$0xf]
        %v805 = vld [vmem:[#allocation9 + $0x7c] sm:$0xf]
        %v806 = vld [vmem:[#allocation9 + $0x80] sm:$0xf]
        %v807 = vld [vmem:[#allocation9 + $0x84] sm:$0xf]
        %v808 = vld [vmem:[#allocation9 + $0x88] sm:$0xf]
        %v809 = vld [vmem:[#allocation9 + $0x8c] sm:$0xf]
        %v810 = vld [vmem:[#allocation9 + $0x90] sm:$0xf]
        %v811 = vld [vmem:[#allocation9 + $0x94] sm:$0xf]
        %v812 = vld [vmem:[#allocation9 + $0x98] sm:$0xf]
        %v813 = vld [vmem:[#allocation9 + $0x9c] sm:$0xf]
        %v814 = vld [vmem:[#allocation9 + $0xa0] sm:$0xf]
        %v815 = vld [vmem:[#allocation9 + $0xa4] sm:$0xf]
        %v816 = vld [vmem:[#allocation9 + $0xa8] sm:$0xf]
        %v817 = vld [vmem:[#allocation9 + $0xac] sm:$0xf]
        %v818 = vld [vmem:[#allocation9 + $0xb0] sm:$0xf]
        %v819 = vld [vmem:[#allocation9 + $0xb4] sm:$0xf]
        %v820 = vld [vmem:[#allocation9 + $0xb8] sm:$0xf]
        %v821 = vld [vmem:[#allocation9 + $0xbc] sm:$0xf]
        %v822 = vld [vmem:[%s4] sm:$0x1]
        %v824 = vperm.slane %v822, 0
        %vm826 = vcmask 1044480
        %v827 = vrot.slane %v739, 3
        %v828 = vrot.slane %v740, 3
        %v829 = vsel %vm826, %v827, %v828
        %v830 = vrot.slane %v751, 3
        %v831 = vrot.slane %v753, 3
        %v832 = vsel %vm826, %v830, %v831
        %v833 = vrot.slane %v765, 3
        %v834 = vrot.slane %v767, 3
        %v835 = vsel %vm826, %v833, %v834
        %v836 = vrot.slane %v741, 3
        %v837 = vsel %vm826, %v828, %v836
        %v838 = vrot.slane %v755, 3
        %v839 = vsel %vm826, %v831, %v838
        %v840 = vrot.slane %v769, 3
        %v841 = vsel %vm826, %v834, %v840
        %v842 = vrot.slane %v742, 3
        %v843 = vsel %vm826, %v836, %v842
        %v844 = vrot.slane %v757, 3
        %v845 = vsel %vm826, %v838, %v844
        %v846 = vrot.slane %v771, 3
        %v847 = vsel %vm826, %v840, %v846
        %v848 = vrot.slane %v743, 3
        %v849 = vsel %vm826, %v842, %v848
        %v850 = vrot.slane %v756, 3
        %v851 = vsel %vm826, %v844, %v850
        %v852 = vrot.slane %v773, 3
        %v853 = vsel %vm826, %v846, %v852
        %v914 = vunpack.c.l.b16 %v774
        %v915 = vunpack.c.l.b16 %v775
        %v916 = vunpack.c.l.b16 %v776
        %v917 = vunpack.c.l.b16 %v777
        %v918 = vunpack.c.l.b16 %v778
        %v919 = vunpack.c.l.b16 %v779
        %v920 = vunpack.c.l.b16 %v780
        %v921 = vunpack.c.l.b16 %v781
        %v922 = vunpack.c.l.b16 %v782
        %v923 = vunpack.c.l.b16 %v783
        %v924 = vunpack.c.l.b16 %v784
        %v925 = vunpack.c.l.b16 %v785
        %v926 = vunpack.c.l.b16 %v786
        %v927 = vunpack.c.l.b16 %v787
        %v928 = vunpack.c.l.b16 %v788
        %v929 = vunpack.c.l.b16 %v789
        %v930 = vunpack.c.l.b16 %v790
        %v931 = vunpack.c.l.b16 %v791
        %v932 = vunpack.c.l.b16 %v792
        %v933 = vunpack.c.l.b16 %v793
        %v934 = vunpack.c.l.b16 %v794
        %v935 = vunpack.c.l.b16 %v795
        %v936 = vunpack.c.l.b16 %v796
        %v937 = vunpack.c.l.b16 %v797
        %v938 = vunpack.c.l.b16 %v798
        %v939 = vunpack.c.l.b16 %v799
        %v940 = vunpack.c.l.b16 %v800
        %v941 = vunpack.c.l.b16 %v801
        %v942 = vunpack.c.l.b16 %v802
        %v943 = vunpack.c.l.b16 %v803
        %v944 = vunpack.c.l.b16 %v804
        %v945 = vunpack.c.l.b16 %v805
        %v946 = vunpack.c.l.b16 %v806
        %v947 = vunpack.c.l.b16 %v807
        %v948 = vunpack.c.l.b16 %v808
        %v949 = vunpack.c.l.b16 %v809
        %v950 = vunpack.c.l.b16 %v810
        %v951 = vunpack.c.l.b16 %v811
        %v952 = vunpack.c.l.b16 %v812
        %v953 = vunpack.c.l.b16 %v813
        %v954 = vunpack.c.l.b16 %v814
        %v955 = vunpack.c.l.b16 %v815
        %v956 = vunpack.c.l.b16 %v816
        %v957 = vunpack.c.l.b16 %v817
        %v958 = vunpack.c.l.b16 %v818
        %v959 = vunpack.c.l.b16 %v819
        %v960 = vunpack.c.l.b16 %v820
        %v961 = vunpack.c.l.b16 %v821
        %v962 = vpack.c.b16 %v915, %v914
        %v963 = vpack.c.b16 %v917, %v916
        %v964 = vpack.c.b16 %v919, %v918
        %v965 = vpack.c.b16 %v921, %v920
        %v966 = vpack.c.b16 %v923, %v922
        %v967 = vpack.c.b16 %v925, %v924
        %v968 = vpack.c.b16 %v927, %v926
        %v969 = vpack.c.b16 %v929, %v928
        %v970 = vpack.c.b16 %v931, %v930
        %v971 = vpack.c.b16 %v933, %v932
        %v972 = vpack.c.b16 %v935, %v934
        %v973 = vpack.c.b16 %v937, %v936
        %v974 = vpack.c.b16 %v939, %v938
        %v975 = vpack.c.b16 %v941, %v940
        %v976 = vpack.c.b16 %v943, %v942
        %v977 = vpack.c.b16 %v945, %v944
        %v978 = vpack.c.b16 %v947, %v946
        %v979 = vpack.c.b16 %v949, %v948
        %v980 = vpack.c.b16 %v951, %v950
        %v981 = vpack.c.b16 %v953, %v952
        %v982 = vpack.c.b16 %v955, %v954
        %v983 = vpack.c.b16 %v957, %v956
        %v984 = vpack.c.b16 %v959, %v958
        %v985 = vpack.c.b16 %v961, %v960
        %1010 = vmatpush.bf16.msra.mxu0 %v969
        %1011 = vmatpush.bf16.msra.mxu0 %v968
        %1012 = vmatpush.bf16.msra.mxu0 %v967
        %1013 = vmatpush.bf16.msra.mxu0 %v966
        %1014 = vmatpush.bf16.msra.mxu0 %v965
        %1015 = vmatpush.bf16.msra.mxu0 %v964
        %1016 = vmatpush.bf16.msra.mxu0 %v963
        %1017 = vmatpush.bf16.msra.mxu0 %v962
        %1018 = vmatmul.bf16.gmra.mxu0 %v829
        %v1019 = vpop.f32.mrf.mxu0
        %v1020 = vadd.f32 %v824, %v1019
        %v1021 = vpop.f32.mrf.mxu0
        %v1022 = vadd.f32 %v824, %v1021
        %1023 = vmatmul.bf16.gmra.mxu0 %v837
        %v1024 = vpop.f32.mrf.mxu0
        %v1025 = vadd.f32 %v824, %v1024
        %v1026 = vpop.f32.mrf.mxu0
        %v1027 = vadd.f32 %v824, %v1026
        %1028 = vmatmul.bf16.gmra.mxu0 %v843
        %v1029 = vpop.f32.mrf.mxu0
        %v1030 = vadd.f32 %v824, %v1029
        %v1031 = vpop.f32.mrf.mxu0
        %v1032 = vadd.f32 %v824, %v1031
        %1033 = vmatmul.bf16.gmra.mxu0 %v849
        %v1034 = vpop.f32.mrf.mxu0
        %v1035 = vadd.f32 %v824, %v1034
        %v1036 = vpop.f32.mrf.mxu0
        %v1037 = vadd.f32 %v824, %v1036
        %1038 = vdwg.mxu0
        %1039 = vmatpush.bf16.msra.mxu0 %v977
        %1040 = vmatpush.bf16.msra.mxu0 %v976
        %1041 = vmatpush.bf16.msra.mxu0 %v975
        %1042 = vmatpush.bf16.msra.mxu0 %v974
        %1043 = vmatpush.bf16.msra.mxu0 %v973
        %1044 = vmatpush.bf16.msra.mxu0 %v972
        %1045 = vmatpush.bf16.msra.mxu0 %v971
        %1046 = vmatpush.bf16.msra.mxu0 %v970
        %1047 = vmatmul.bf16.gmra.mxu0 %v832
        %v1048 = vpop.f32.mrf.mxu0
        %v1049 = vadd.f32 %v1020, %v1048
        %v1050 = vpop.f32.mrf.mxu0
        %v1051 = vadd.f32 %v1022, %v1050
        %1052 = vmatmul.bf16.gmra.mxu0 %v839
        %v1053 = vpop.f32.mrf.mxu0
        %v1054 = vadd.f32 %v1025, %v1053
        %v1055 = vpop.f32.mrf.mxu0
        %v1056 = vadd.f32 %v1027, %v1055
        %1057 = vmatmul.bf16.gmra.mxu0 %v845
        %v1058 = vpop.f32.mrf.mxu0
        %v1059 = vadd.f32 %v1030, %v1058
        %v1060 = vpop.f32.mrf.mxu0
        %v1061 = vadd.f32 %v1032, %v1060
        %1062 = vmatmul.bf16.gmra.mxu0 %v851
        %v1063 = vpop.f32.mrf.mxu0
        %v1064 = vadd.f32 %v1035, %v1063
        %v1065 = vpop.f32.mrf.mxu0
        %v1066 = vadd.f32 %v1037, %v1065
        %1067 = vdwg.mxu0
        %1068 = vmatpush.bf16.msra.mxu0 %v985
        %1069 = vmatpush.bf16.msra.mxu0 %v984
        %1070 = vmatpush.bf16.msra.mxu0 %v983
        %1071 = vmatpush.bf16.msra.mxu0 %v982
        %1072 = vmatpush.bf16.msra.mxu0 %v981
        %1073 = vmatpush.bf16.msra.mxu0 %v980
        %1074 = vmatpush.bf16.msra.mxu0 %v979
        %1075 = vmatpush.bf16.msra.mxu0 %v978
        %1076 = vmatmul.bf16.gmra.mxu0 %v835
        %v1077 = vpop.f32.mrf.mxu0
        %v1078 = vadd.f32 %v1049, %v1077
        %v1079 = vpop.f32.mrf.mxu0
        %v1080 = vadd.f32 %v1051, %v1079
        %1081 = vmatmul.bf16.gmra.mxu0 %v841
        %v1082 = vpop.f32.mrf.mxu0
        %v1083 = vadd.f32 %v1054, %v1082
        %v1084 = vpop.f32.mrf.mxu0
        %v1085 = vadd.f32 %v1056, %v1084
        %1086 = vmatmul.bf16.gmra.mxu0 %v847
        %v1087 = vpop.f32.mrf.mxu0
        %v1088 = vadd.f32 %v1059, %v1087
        %v1089 = vpop.f32.mrf.mxu0
        %v1090 = vadd.f32 %v1061, %v1089
        %1091 = vmatmul.bf16.gmra.mxu0 %v853
        %v1092 = vpop.f32.mrf.mxu0
        %v1093 = vadd.f32 %v1064, %v1092
        %v1094 = vpop.f32.mrf.mxu0
        %v1095 = vadd.f32 %v1066, %v1094
        %1096 = vdwg.mxu0
        %v1097 = vld [vmem:[%s324] sm:$0xff]
        %v1098 = vld [vmem:[%s324 + $0x8] sm:$0xff]
        %v1099 = vld [vmem:[%s324 + $0x10] sm:$0xff]
        %v1100 = vld [vmem:[%s324 + $0x18] sm:$0xff]
        %v1101 = vld [vmem:[%s324 + $0x20] sm:$0xff]
        %v1102 = vld [vmem:[%s324 + $0x28] sm:$0xff]
        %v1103 = vld [vmem:[%s324 + $0x30] sm:$0xff]
        %v1104 = vld [vmem:[%s324 + $0x38] sm:$0xff]
        %v1105 = vadd.f32 %v1078, %v1097
        %v1106 = vadd.f32 %v1080, %v1098
        %v1107 = vadd.f32 %v1083, %v1099
        %v1108 = vadd.f32 %v1085, %v1100
        %v1109 = vadd.f32 %v1088, %v1101
        %v1110 = vadd.f32 %v1090, %v1102
        %v1111 = vadd.f32 %v1093, %v1103
        %v1112 = vadd.f32 %v1095, %v1104
        %1113 = vst [vmem:[%s386] sm:$0xff] %v1105
        %1114 = vst [vmem:[%s386 + $0x8] sm:$0xff] %v1106
        %1115 = vst [vmem:[%s386 + $0x10] sm:$0xff] %v1107
        %1116 = vst [vmem:[%s386 + $0x18] sm:$0xff] %v1108
        %1117 = vst [vmem:[%s386 + $0x20] sm:$0xff] %v1109
        %1118 = vst [vmem:[%s386 + $0x28] sm:$0xff] %v1110
        %1119 = vst [vmem:[%s386 + $0x30] sm:$0xff] %v1111
        %1120 = vst [vmem:[%s386 + $0x38] sm:$0xff] %v1112
        %s1121 = sand.u32 %s190, 1
        %s1122 = scalar_lea.sflag [#allocation5], %s1121
        %s1123 = sand.u32 %s190, 1
        %s1124 = smul.addr %s1123, 64
        %s1125 = scalar_lea.vmem [#allocation11], %s1124
        // Predicated region
        $region73: #{fwd.1} parent=39 // pred_check
          %p1126 = pneg %p200
        $region74: #{fwd.1} parent=39 // pred_check_branch
          %1128 = sbr.rel (%p1126) target = $region76
        $region75: #{fwd.1} parent=39 // pred_region
          %s1129 = smul.u32 8, %s31
          %1131 = vsyncadd %s1122, 0
          %s1132 = smul.addr %s30, 16
          %s1133 = sadd.s32 %s1129, %s1132
          %s1134 = smul.addr %s1133, 8
          %s1135 = scalar_lea.hbm %s5, %s1134
          %s1136 = sshll.u32 %s1125, 4
          %s1137 = int_to_ptr.vmem [resolvable:$true] %s1136
          %s1138 = sshll.u32 %s1135, 4
          %s1139 = int_to_ptr.hbm [resolvable:$true] %s1138
          %1144 = dma.vmem_to_hbm [thread:$0]  %s1137, 1024, %s1139, %s1122, 128, 128, 8
        $region76: #{fwd.1} parent=39 // pred_fallthru
          _
      $region40: #{fwd.1} parent=5 // pred_fallthru
        _
      %p1145 = scmp.le.s32.totalorder 2, %s21
      // Predicated region
      $region77: #{fwd.1} parent=5 // pred_check
        %p1146 = pneg %p1145
      $region78: #{fwd.1} parent=5 // pred_check_branch
        %1148 = sbr.rel (%p1146) target = $region80
      $region79: #{fwd.1} parent=5 // pred_region
        %s1149 = ssub.s32 %s21, 2
        // Predicated region
        $region81: #{fwd.1} parent=79 // pred_check
          %p1150 = pneg %p206
        $region82: #{fwd.1} parent=79 // pred_check_branch
          %1152 = sbr.rel (%p1150) target = $region84
        $region83: #{fwd.1} parent=79 // pred_region
          %s1153 = sand.u32 %s191, 1
          %s1154 = scalar_lea.sflag [#allocation5], %s1153
          %s1155 = sand.u32 %s191, 1
          %s1156 = smul.addr %s1155, 64
          %s1157 = scalar_lea.vmem [#allocation11], %s1156
          %1159 = dma.done %s1154, 1024
        $region84: #{fwd.1} parent=79 // pred_fallthru
          _
      $region80: #{fwd.1} parent=5 // pred_fallthru
        _
    $region6: #{fwd.1} parent=1 // loop_footer
      %s25 = sadd.s32 1, %s21
    $region7: #{fwd.1} parent=1 // loop_footer_branch
      %20 = sbr.rel target = $region3
    $region8: #{fwd.1} parent=1 // loop_exit
      _
    %1160 = vsyncpa [#allocation4], 1
    %s1161 = scalar_lea.sflag [#allocation4], 1
    %1162 = vsyncpa %s1161, 1
    %1163 = vsyncpa [#allocation7], 1
    %s1164 = scalar_lea.sflag [#allocation7], 1
    %1165 = vsyncpa %s1164, 1
    %1166 = vsyncpa [#allocation10], 1
    %1167 = vsyncpa [#allocation5], 1
    %s1168 = scalar_lea.sflag [#allocation5], 1
    %1169 = vsyncpa %s1168, 1

</llo_original>
